<compile_context>
chip_gen: v7x
topology: tpu7x:2x2x1
jax: 0.10.0
libtpu: 0.0.40
codegen_flags: <defaults>
</compile_context>

<pallas_src>
import functools

import jax
import jax.numpy as jnp
from jax.experimental import pallas as pl
from jax.experimental.pallas import tpu as pltpu


def _round_up(x, m):
    return ((x + m - 1) // m) * m


def _silu(x):
    return x * jax.nn.sigmoid(x)


def stylization_kernel(scale_ref, shift_ref, h_ref, gamma_ref, beta_ref,
                       w_out_ref, b_out_ref, o_ref, *, d_true, matmul_dtype):
    """One grid step = one (batch, seq-tile) block of h."""
    h = h_ref[0].astype(jnp.float32)                                  # (TT, D_pad)

    # --- LayerNorm over the true feature dim (padded lanes are zero) --------
    inv_d = 1.0 / d_true
    mean = jnp.sum(h, axis=-1, keepdims=True) * inv_d
    mean_sq = jnp.sum(h * h, axis=-1, keepdims=True) * inv_d
    var = mean_sq - mean * mean
    hn = (h - mean) * jax.lax.rsqrt(var + 1e-5)
    hn = hn * gamma_ref[...].astype(jnp.float32) + beta_ref[...].astype(jnp.float32)

    # --- FiLM-style modulation: norm(h) * (1 + scale) + shift ---------------
    scale = scale_ref[0].astype(jnp.float32)                          # (1, D_pad)
    shift = shift_ref[0].astype(jnp.float32)                          # (1, D_pad)
    h2 = hn * (1.0 + scale) + shift

    # --- out_layers: SiLU -> Dropout(identity at inference) -> Linear(D, D) -
    h2 = h2 * jax.nn.sigmoid(h2)
    out = jnp.dot(h2.astype(matmul_dtype), w_out_ref[...],
                  preferred_element_type=jnp.float32)                 # fp32 accumulate
    out = out + b_out_ref[...].astype(jnp.float32)
    o_ref[0] = out.astype(o_ref.dtype)


def stylization_block(h, emb, params, *, seq_tile=256, matmul_dtype=jnp.bfloat16):
    """h: (B, T, D), emb: (B, E). Weights stored as (in, out): y = x @ W + b."""
    B, T, D = h.shape

    # --- emb path hoisted out of the kernel (degenerate M=1 matmul -> XLA) --
    emb_out = _silu(emb) @ params["w_emb"] + params["b_emb"][0]       # (B, 2D)
    scale = emb_out[:, :D]
    shift = emb_out[:, D:]

    # --- padding: lane-dense feature dim + 8-aligned sequence tiles ---------
    D_pad = _round_up(D, 128)
    TT = min(seq_tile, _round_up(T, 8))
    T_pad = _round_up(T, TT)
    pad_d, pad_t = D_pad - D, T_pad - T

    h_p = jnp.pad(h, ((0, 0), (0, pad_t), (0, pad_d)))
    scale_p = jnp.pad(scale, ((0, 0), (0, pad_d)))[:, None, :]        # (B, 1, D_pad)
    shift_p = jnp.pad(shift, ((0, 0), (0, pad_d)))[:, None, :]
    gamma_p = jnp.pad(params["gamma"], ((0, 0), (0, pad_d)))
    beta_p = jnp.pad(params["beta"], ((0, 0), (0, pad_d)))
    w_out_p = jnp.pad(params["w_out"], ((0, pad_d), (0, pad_d))).astype(matmul_dtype)
    b_out_p = jnp.pad(params["b_out"], ((0, 0), (0, pad_d)))

    grid = (B, T_pad // TT)

    # Rough VMEM budget: double-buffered h/out tiles + fp32 intermediates +
    # resident weights + slack; clamped so it also fits v7x's 64 MiB VMEM.
    tile_bytes = TT * D_pad * 4
    weight_bytes = D_pad * D_pad * jnp.dtype(matmul_dtype).itemsize
    vmem_limit = int(min(max(8 * tile_bytes + 2 * weight_bytes + (4 << 20),
                             16 << 20), 48 << 20))

    kernel = functools.partial(stylization_kernel, d_true=float(D),
                               matmul_dtype=matmul_dtype)

    out = pl.pallas_call(
        kernel,
        out_shape=jax.ShapeDtypeStruct((B, T_pad, D_pad), h.dtype),
        grid=grid,
        in_specs=[
            pl.BlockSpec((1, 1, D_pad), lambda b, t: (b, 0, 0)),      # scale
            pl.BlockSpec((1, 1, D_pad), lambda b, t: (b, 0, 0)),      # shift
            pl.BlockSpec((1, TT, D_pad), lambda b, t: (b, t, 0)),     # h tile
            pl.BlockSpec((1, D_pad), lambda b, t: (0, 0)),            # LN gamma
            pl.BlockSpec((1, D_pad), lambda b, t: (0, 0)),            # LN beta
            pl.BlockSpec((D_pad, D_pad), lambda b, t: (0, 0)),        # w_out
            pl.BlockSpec((1, D_pad), lambda b, t: (0, 0)),            # b_out
        ],
        out_specs=pl.BlockSpec((1, TT, D_pad), lambda b, t: (b, t, 0)),
        compiler_params=pltpu.CompilerParams(
            dimension_semantics=("parallel", "parallel"),
            vmem_limit_bytes=vmem_limit),
        # TODO(synk): on v7x, mark the constant-index weight specs with
        # pipeline_mode=pl.Buffered(1) to reclaim their second resident buffer
        # when D is large (kept default here for maximum compile portability).
    )(scale_p, shift_p, h_p, gamma_p, beta_p, w_out_p, b_out_p)

    return out[:, :T, :D]


def reference(h, emb, params):
    """Pure-JAX reference of the PyTorch forward (dropout = identity / eval)."""
    e = _silu(emb)
    emb_out = e @ params["w_emb"] + params["b_emb"][0]                # (B, 2D)
    D = h.shape[-1]
    scale = emb_out[:, None, :D]
    shift = emb_out[:, None, D:]
    mean = jnp.mean(h, axis=-1, keepdims=True)
    var = jnp.mean(jnp.square(h - mean), axis=-1, keepdims=True)
    hn = (h - mean) * jax.lax.rsqrt(var + 1e-5)
    hn = hn * params["gamma"][0] + params["beta"][0]
    h2 = hn * (1.0 + scale) + shift
    h2 = _silu(h2)
    return h2 @ params["w_out"] + params["b_out"][0]


if __name__ == "__main__":
    # NOTE: at these micro shapes the pallas_call fixed overhead dominates;
    # benchmark/tune only at production (T, D) sizes.
    B, T, D, E = 2, 8, 32, 16

    key = jax.random.PRNGKey(0)
    k_h, k_e, k_we, k_be, k_g, k_b, k_wo, k_bo = jax.random.split(key, 8)

    h = jax.random.normal(k_h, (B, T, D), dtype=jnp.float32)
    emb = jax.random.normal(k_e, (B, E), dtype=jnp.float32)

    # Deterministic synthetic parameters.  The original module zero-inits
    # out_layers (zero_module); small nonzero values keep the matmul exercised.
    params = {
        "w_emb": 0.1 * jax.random.normal(k_we, (E, 2 * D), dtype=jnp.float32),
        "b_emb": 0.1 * jax.random.normal(k_be, (1, 2 * D), dtype=jnp.float32),
        "gamma": 1.0 + 0.1 * jax.random.normal(k_g, (1, D), dtype=jnp.float32),
        "beta": 0.1 * jax.random.normal(k_b, (1, D), dtype=jnp.float32),
        "w_out": 0.1 * jax.random.normal(k_wo, (D, D), dtype=jnp.float32),
        "b_out": 0.1 * jax.random.normal(k_bo, (1, D), dtype=jnp.float32),
    }

    ref = reference(h, emb, params)

    # fp32 matmul path: tight check against the pure-JAX reference.
    out_f32 = jax.block_until_ready(
        stylization_block(h, emb, params, matmul_dtype=jnp.float32))
    assert out_f32.shape == (B, T, D)
    assert jnp.allclose(out_f32, ref, atol=1e-4, rtol=1e-4), "fp32 mismatch vs reference"

    # bf16-operand / fp32-accumulate matmul path (production default on v6e/v7x).
    out_bf16 = jax.block_until_ready(stylization_block(h, emb, params))
    assert out_bf16.shape == (B, T, D)
    assert jnp.allclose(out_bf16, ref, atol=5e-2, rtol=5e-2), "bf16 mismatch vs reference"

    print("KERNEL_OK")
</pallas_src>

<mosaic_0001>
module attributes {stable_mosaic.version = 11 : i64} {
  func.func @stylization_kernel(%arg0: i32, %arg1: i32, %arg2: memref<1x1x128xf32, #tpu.memory_space<vmem>>, %arg3: memref<1x1x128xf32, #tpu.memory_space<vmem>>, %arg4: memref<1x8x128xf32, #tpu.memory_space<vmem>>, %arg5: memref<1x128xf32, #tpu.memory_space<vmem>>, %arg6: memref<1x128xf32, #tpu.memory_space<vmem>>, %arg7: memref<128x128xf32, #tpu.memory_space<vmem>>, %arg8: memref<1x128xf32, #tpu.memory_space<vmem>>, %arg9: memref<1x8x128xf32, #tpu.memory_space<vmem>>) attributes {dimension_semantics = [#tpu.dimension_semantics<parallel>, #tpu.dimension_semantics<parallel>], iteration_bounds = array<i64: 2, 1>, scalar_prefetch = 0 : i64, scratch_operands = 0 : i64, tpu.core_type = #tpu.core_type<tc>, window_params = [{transform_indices = @transform_0, window_bounds = array<i64: 1, 1, 128>}, {transform_indices = @transform_1, window_bounds = array<i64: 1, 1, 128>}, {transform_indices = @transform_2, window_bounds = array<i64: 1, 8, 128>}, {pipeline_mode = #tpu.pipeline_mode<synchronous>, transform_indices = @transform_3, window_bounds = array<i64: 1, 128>}, {pipeline_mode = #tpu.pipeline_mode<synchronous>, transform_indices = @transform_4, window_bounds = array<i64: 1, 128>}, {pipeline_mode = #tpu.pipeline_mode<synchronous>, transform_indices = @transform_5, window_bounds = array<i64: 128, 128>}, {pipeline_mode = #tpu.pipeline_mode<synchronous>, transform_indices = @transform_6, window_bounds = array<i64: 1, 128>}, {transform_indices = @transform_7, window_bounds = array<i64: 1, 8, 128>}]} {
    %c0 = arith.constant 0 : index
    %c0_0 = arith.constant 0 : index
    %c0_1 = arith.constant 0 : index
    %0 = vector.load %arg4[%c0, %c0_0, %c0_1] : memref<1x8x128xf32, #tpu.memory_space<vmem>>, vector<1x8x128xf32>
    %1 = vector.shape_cast %0 : vector<1x8x128xf32> to vector<8x128xf32>
    %cst = arith.constant dense<0.000000e+00> : vector<8xf32>
    %2 = vector.multi_reduction <add>, %1, %cst [1] : vector<8x128xf32> to vector<8xf32>
    %3 = vector.shape_cast %2 : vector<8xf32> to vector<8x1xf32>
    %cst_2 = arith.constant 3.125000e-02 : f32
    %4 = vector.broadcast %cst_2 : f32 to vector<8x1xf32>
    %5 = arith.mulf %3, %4 : vector<8x1xf32>
    %6 = arith.mulf %1, %1 : vector<8x128xf32>
    %cst_3 = arith.constant dense<0.000000e+00> : vector<8xf32>
    %7 = vector.multi_reduction <add>, %6, %cst_3 [1] : vector<8x128xf32> to vector<8xf32>
    %8 = vector.shape_cast %7 : vector<8xf32> to vector<8x1xf32>
    %cst_4 = arith.constant 3.125000e-02 : f32
    %9 = vector.broadcast %cst_4 : f32 to vector<8x1xf32>
    %10 = arith.mulf %8, %9 : vector<8x1xf32>
    %11 = arith.mulf %5, %5 : vector<8x1xf32>
    %12 = arith.subf %10, %11 : vector<8x1xf32>
    %13 = vector.broadcast %5 : vector<8x1xf32> to vector<8x128xf32>
    %14 = arith.subf %1, %13 : vector<8x128xf32>
    %cst_5 = arith.constant 9.99999974E-6 : f32
    %15 = vector.broadcast %cst_5 : f32 to vector<8x1xf32>
    %16 = arith.addf %12, %15 : vector<8x1xf32>
    %17 = math.rsqrt %16 : vector<8x1xf32>
    %18 = vector.broadcast %17 : vector<8x1xf32> to vector<8x128xf32>
    %19 = arith.mulf %14, %18 : vector<8x128xf32>
    %c0_6 = arith.constant 0 : index
    %c0_7 = arith.constant 0 : index
    %20 = vector.load %arg5[%c0_6, %c0_7] : memref<1x128xf32, #tpu.memory_space<vmem>>, vector<1x128xf32>
    %21 = vector.broadcast %20 : vector<1x128xf32> to vector<8x128xf32>
    %22 = arith.mulf %19, %21 : vector<8x128xf32>
    %c0_8 = arith.constant 0 : index
    %c0_9 = arith.constant 0 : index
    %23 = vector.load %arg6[%c0_8, %c0_9] : memref<1x128xf32, #tpu.memory_space<vmem>>, vector<1x128xf32>
    %24 = vector.broadcast %23 : vector<1x128xf32> to vector<8x128xf32>
    %25 = arith.addf %22, %24 : vector<8x128xf32>
    %c0_10 = arith.constant 0 : index
    %c0_11 = arith.constant 0 : index
    %c0_12 = arith.constant 0 : index
    %26 = vector.load %arg2[%c0_10, %c0_11, %c0_12] : memref<1x1x128xf32, #tpu.memory_space<vmem>>, vector<1x1x128xf32>
    %27 = vector.shape_cast %26 : vector<1x1x128xf32> to vector<1x128xf32>
    %c0_13 = arith.constant 0 : index
    %c0_14 = arith.constant 0 : index
    %c0_15 = arith.constant 0 : index
    %28 = vector.load %arg3[%c0_13, %c0_14, %c0_15] : memref<1x1x128xf32, #tpu.memory_space<vmem>>, vector<1x1x128xf32>
    %29 = vector.shape_cast %28 : vector<1x1x128xf32> to vector<1x128xf32>
    %cst_16 = arith.constant 1.000000e+00 : f32
    %30 = vector.broadcast %cst_16 : f32 to vector<1x128xf32>
    %31 = arith.addf %30, %27 : vector<1x128xf32>
    %32 = vector.broadcast %31 : vector<1x128xf32> to vector<8x128xf32>
    %33 = arith.mulf %25, %32 : vector<8x128xf32>
    %34 = vector.broadcast %29 : vector<1x128xf32> to vector<8x128xf32>
    %35 = arith.addf %33, %34 : vector<8x128xf32>
    %36 = arith.negf %35 : vector<8x128xf32>
    %37 = math.exp %36 : vector<8x128xf32>
    %cst_17 = arith.constant 1.000000e+00 : f32
    %38 = vector.broadcast %cst_17 : f32 to vector<8x128xf32>
    %39 = arith.addf %38, %37 : vector<8x128xf32>
    %40 = arith.divf %38, %39 : vector<8x128xf32>
    %41 = arith.mulf %35, %40 : vector<8x128xf32>
    %c0_18 = arith.constant 0 : index
    %c0_19 = arith.constant 0 : index
    %42 = vector.load %arg7[%c0_18, %c0_19] : memref<128x128xf32, #tpu.memory_space<vmem>>, vector<128x128xf32>
    %cst_20 = arith.constant dense<0.000000e+00> : vector<8x128xf32>
    %43 = tpu.matmul %41, %42, %cst_20 {dimension_numbers = #tpu.dot_dimension_numbers<[1], [0], [0], [1], [0, 0, 1, 1], [], []>} : vector<8x128xf32>, vector<128x128xf32>, vector<8x128xf32> -> vector<8x128xf32>
    %c0_21 = arith.constant 0 : index
    %c0_22 = arith.constant 0 : index
    %44 = vector.load %arg8[%c0_21, %c0_22] : memref<1x128xf32, #tpu.memory_space<vmem>>, vector<1x128xf32>
    %45 = vector.broadcast %44 : vector<1x128xf32> to vector<8x128xf32>
    %46 = arith.addf %43, %45 : vector<8x128xf32>
    %c0_23 = arith.constant 0 : index
    %c0_24 = arith.constant 0 : index
    %c0_25 = arith.constant 0 : index
    %47 = vector.load %arg9[%c0_23, %c0_24, %c0_25] : memref<1x8x128xf32, #tpu.memory_space<vmem>>, vector<1x8x128xf32>
    %48 = vector.shape_cast %47 : vector<1x8x128xf32> to vector<8x128xf32>
    %49 = vector.shape_cast %46 : vector<8x128xf32> to vector<1x8x128xf32>
    tpu.vector_store %arg9[%c0_23, %c0_24, %c0_25], %49 {strides = array<i32>} : memref<1x8x128xf32, #tpu.memory_space<vmem>>, vector<1x8x128xf32>,
    return
  }
  func.func @transform_0(%arg0: i32, %arg1: i32) -> (i32, i32, i32) {
    %c0_i32 = arith.constant 0 : i32
    %c0_i32_0 = arith.constant 0 : i32
    %c0_i32_1 = arith.constant 0 : i32
    return %arg0, %c0_i32, %c0_i32_0 : i32, i32, i32
  }
  func.func @transform_1(%arg0: i32, %arg1: i32) -> (i32, i32, i32) {
    %c0_i32 = arith.constant 0 : i32
    %c0_i32_0 = arith.constant 0 : i32
    %c0_i32_1 = arith.constant 0 : i32
    return %arg0, %c0_i32, %c0_i32_0 : i32, i32, i32
  }
  func.func @transform_2(%arg0: i32, %arg1: i32) -> (i32, i32, i32) {
    %c0_i32 = arith.constant 0 : i32
    %c0_i32_0 = arith.constant 0 : i32
    return %arg0, %arg1, %c0_i32 : i32, i32, i32
  }
  func.func @transform_3(%arg0: i32, %arg1: i32) -> (i32, i32) {
    %c0_i32 = arith.constant 0 : i32
    %c0_i32_0 = arith.constant 0 : i32
    %c0_i32_1 = arith.constant 0 : i32
    return %c0_i32, %c0_i32_0 : i32, i32
  }
  func.func @transform_4(%arg0: i32, %arg1: i32) -> (i32, i32) {
    %c0_i32 = arith.constant 0 : i32
    %c0_i32_0 = arith.constant 0 : i32
    %c0_i32_1 = arith.constant 0 : i32
    return %c0_i32, %c0_i32_0 : i32, i32
  }
  func.func @transform_5(%arg0: i32, %arg1: i32) -> (i32, i32) {
    %c0_i32 = arith.constant 0 : i32
    %c0_i32_0 = arith.constant 0 : i32
    %c0_i32_1 = arith.constant 0 : i32
    return %c0_i32, %c0_i32_0 : i32, i32
  }
  func.func @transform_6(%arg0: i32, %arg1: i32) -> (i32, i32) {
    %c0_i32 = arith.constant 0 : i32
    %c0_i32_0 = arith.constant 0 : i32
    %c0_i32_1 = arith.constant 0 : i32
    return %c0_i32, %c0_i32_0 : i32, i32
  }
  func.func @transform_7(%arg0: i32, %arg1: i32) -> (i32, i32, i32) {
    %c0_i32 = arith.constant 0 : i32
    %c0_i32_0 = arith.constant 0 : i32
    return %arg0, %arg1, %c0_i32 : i32, i32, i32
  }
}

</mosaic_0001>

<llo_original>
// kernel: tpu_custom_call.1
$region0: #{tpu_custom_call.1}
  #allocation0 [shape = 'u32[]', space=smem, size = 0x4, offset = 0x4, fixed_abs, tag = 'smem constant byte address 0x4 - core index']
  #allocation1 [shape = 'u32[144,128]{1,0:T(1,128)}', space=vmem, size = 0x12000, scoped, tag = 'internal scratch']
  %s0 = inlined_call_operand.hbm [shape: f32[2,1,128], index: 0, kind: input, shape index: {}]
  %s1 = inlined_call_operand.vmem [shape: f32[2,1,128], index: 1, kind: input, shape index: {}]
  %s2 = inlined_call_operand.hbm [shape: f32[2,8,128], index: 2, kind: input, shape index: {}]
  %s3 = inlined_call_operand.vmem [shape: f32[1,128], index: 3, kind: input, shape index: {}]
  %s4 = inlined_call_operand.vmem [shape: f32[1,128], index: 4, kind: input, shape index: {}]
  %s5 = inlined_call_operand.hbm [shape: f32[128,128], index: 5, kind: input, shape index: {}]
  %s6 = inlined_call_operand.vmem [shape: f32[1,128], index: 6, kind: input, shape index: {}]
  %s7 = inlined_call_operand.hbm [shape: f32[2,8,128], index: 7, kind: output, shape index: {}]
  %s8 = sld [smem:[#allocation0]]
  $region73: #{tpu_custom_call.1} parent=0
    _
  %s10 = ssub.s32 1, %s8
  %s11 = scalar_select 0, %s10, %s8
  $region1: #{tpu_custom_call.1} parent=0
    #allocation2 [shape = 'u8[1024]{0}', space=vmem, size = 0x400, scoped, tag = 'input window, operand 0']
    #allocation3 [shape = 's32[2]{0}', space=sflag, size = 0x8, scoped, tag = 'scoped memory for tpu_custom_call.1']
    #allocation4 [shape = 's32[2]{0}', space=sflag, size = 0x8, scoped, tag = 'scoped memory for tpu_custom_call.1']
    #allocation5 [shape = 'u8[8192]{0}', space=vmem, size = 0x2000, scoped, tag = 'input window, operand 2']
    #allocation6 [shape = 's32[2]{0}', space=sflag, size = 0x8, scoped, tag = 'scoped memory for tpu_custom_call.1']
    #allocation7 [shape = 'u8[65536]{0}', space=vmem, size = 0x10000, scoped, tag = 'input window, operand 5, single buffered']
    #allocation8 [shape = 'u8[8192]{0}', space=vmem, size = 0x2000, scoped, tag = 'output window, operand 0']
    %12 = vsyncpa [#allocation3], 0
    %s13 = scalar_lea.sflag [#allocation3], 1
    %14 = vsyncpa %s13, 0
    %15 = vsyncpa [#allocation6], 0
    %s16 = scalar_lea.sflag [#allocation6], 1
    %17 = vsyncpa %s16, 0
    %18 = vsyncpa [#allocation4], 0
    %s19 = scalar_lea.sflag [#allocation4], 1
    %20 = vsyncpa %s19, 0
    loop: start=0, step=1, limit=4
    $region2: #{tpu_custom_call.1} parent=1 // loop_pre_header
      _
    $region3: #{tpu_custom_call.1} parent=1 // loop_header
      %s22 = sphi 0, %s26
      %p23 = scmp.ge.s32.totalorder %s22, 4
      %s29 = sphi 0, %s41
      %s30 = sphi 0, %s37
      %s31 = sphi 0, %s29
      %s32 = sphi 0, %s30
      %s33 = sphi 0, %s31
      %s34 = sphi 0, %s32
      %s44 = sphi 0, %s46
      %s47 = sphi 0, %s44
      %s48 = sphi 0, %s47
      %s64 = sphi 0, %s48
      %s70 = sphi 0, %s72
      %s73 = sphi 0, %s70
      %s74 = sphi 0, %s73
      %s90 = sphi 0, %s74
      %s98 = sphi 0, %s100
      %s101 = sphi 0, %s98
      %s102 = sphi 0, %s101
      %s118 = sphi 0, %s102
      %s122 = sphi 0, %s122
      %s124 = sphi 0, %s122
      %s125 = sphi 0, %s124
      %s139 = sphi 0, %s125
      %s143 = sphi 0, %s143
      %s145 = sphi 0, %s143
      %s146 = sphi 0, %s145
      %s160 = sphi 0, %s146
      %s164 = sphi 0, %s164
      %s166 = sphi 0, %s164
      %s167 = sphi 0, %s166
      %s181 = sphi 0, %s167
      %s185 = sphi 0, %s185
      %s187 = sphi 0, %s185
      %s188 = sphi 0, %s187
      %s202 = sphi 0, %s188
      %s210 = sphi 0, %s212
      %s213 = sphi 0, %s210
      %s214 = sphi 0, %s213
      %s230 = sphi 0, %s214
    $region4: #{tpu_custom_call.1} parent=1 // loop_header_branch
      %25 = sbr.rel (%p23) target = $region8
    $region5: #{tpu_custom_call.1} parent=1 // loop_body
      %s27 = ssub.s32 %s22, 1
      %s28 = ssub.s32 %s22, 2
      %s35 = sadd.s32 1, %s30
      %p36 = scmp.ge.s32.totalorder %s35, 1
      %s37 = scalar_select %p36, 0, %s35
      %s38 = sadd.s32 1, %s29
      %s39 = scalar_select %p36, %s38, %s29
      %p40 = scmp.ge.s32.totalorder %s39, 2
      %s41 = scalar_select %p40, 0, %s39
      %s42 = ssub.s32 %s29, %s41
      %p43 = scmp.eq.s32.totalorder %s42, 0
      %s45 = sadd.s32 %s44, 1
      %s46 = scalar_select %p43, %s44, %s45
      %p49 = pneg %p43
      %p50 = scmp.eq.s32.totalorder %s22, 1
      %p51 = por %p49, %p50
      %p52 = scmp.ne.s32.totalorder %s44, %s47
      %p53 = scmp.eq.s32.totalorder %s22, 0
      %p54 = por %p52, %p53
      %p55 = scmp.ne.s32.totalorder %s44, %s47
      %p56 = scmp.eq.s32.totalorder %s27, 1
      %p57 = por %p55, %p56
      %p58 = scmp.ne.s32.totalorder %s47, %s48
      %p59 = scmp.eq.s32.totalorder %s27, 0
      %p60 = por %p58, %p59
      %p61 = scmp.ne.s32.totalorder %s47, %s48
      %p62 = scmp.eq.s32.totalorder %s28, 1
      %p63 = por %p61, %p62
      %p65 = scmp.ne.s32.totalorder %s48, %s64
      %p66 = scmp.eq.s32.totalorder %s28, 0
      %p67 = por %p65, %p66
      %s68 = ssub.s32 %s29, %s41
      %p69 = scmp.eq.s32.totalorder %s68, 0
      %s71 = sadd.s32 %s70, 1
      %s72 = scalar_select %p69, %s70, %s71
      %p75 = pneg %p69
      %p76 = scmp.eq.s32.totalorder %s22, 1
      %p77 = por %p75, %p76
      %p78 = scmp.ne.s32.totalorder %s70, %s73
      %p79 = scmp.eq.s32.totalorder %s22, 0
      %p80 = por %p78, %p79
      %p81 = scmp.ne.s32.totalorder %s70, %s73
      %p82 = scmp.eq.s32.totalorder %s27, 1
      %p83 = por %p81, %p82
      %p84 = scmp.ne.s32.totalorder %s73, %s74
      %p85 = scmp.eq.s32.totalorder %s27, 0
      %p86 = por %p84, %p85
      %p87 = scmp.ne.s32.totalorder %s73, %s74
      %p88 = scmp.eq.s32.totalorder %s28, 1
      %p89 = por %p87, %p88
      %p91 = scmp.ne.s32.totalorder %s74, %s90
      %p92 = scmp.eq.s32.totalorder %s28, 0
      %p93 = por %p91, %p92
      %s94 = ssub.s32 %s29, %s41
      %s95 = ssub.s32 %s30, %s37
      %s96 = sor.u32 %s94, %s95
      %p97 = scmp.eq.s32.totalorder %s96, 0
      %s99 = sadd.s32 %s98, 1
      %s100 = scalar_select %p97, %s98, %s99
      %p103 = pneg %p97
      %p104 = scmp.eq.s32.totalorder %s22, 1
      %p105 = por %p103, %p104
      %p106 = scmp.ne.s32.totalorder %s98, %s101
      %p107 = scmp.eq.s32.totalorder %s22, 0
      %p108 = por %p106, %p107
      %p109 = scmp.ne.s32.totalorder %s98, %s101
      %p110 = scmp.eq.s32.totalorder %s27, 1
      %p111 = por %p109, %p110
      %p112 = scmp.ne.s32.totalorder %s101, %s102
      %p113 = scmp.eq.s32.totalorder %s27, 0
      %p114 = por %p112, %p113
      %p115 = scmp.ne.s32.totalorder %s101, %s102
      %p116 = scmp.eq.s32.totalorder %s28, 1
      %p117 = por %p115, %p116
      %p119 = scmp.ne.s32.totalorder %s102, %s118
      %p120 = scmp.eq.s32.totalorder %s28, 0
      %p121 = por %p119, %p120
      %s123 = sadd.s32 %s122, 1
      %p126 = scmp.eq.s32.totalorder %s22, 1
      %p127 = scmp.ne.s32.totalorder %s122, %s124
      %p128 = scmp.eq.s32.totalorder %s22, 0
      %p129 = por %p127, %p128
      %p130 = scmp.ne.s32.totalorder %s122, %s124
      %p131 = scmp.eq.s32.totalorder %s27, 1
      %p132 = por %p130, %p131
      %p133 = scmp.ne.s32.totalorder %s124, %s125
      %p134 = scmp.eq.s32.totalorder %s27, 0
      %p135 = por %p133, %p134
      %p136 = scmp.ne.s32.totalorder %s124, %s125
      %p137 = scmp.eq.s32.totalorder %s28, 1
      %p138 = por %p136, %p137
      %p140 = scmp.ne.s32.totalorder %s125, %s139
      %p141 = scmp.eq.s32.totalorder %s28, 0
      %p142 = por %p140, %p141
      %s144 = sadd.s32 %s143, 1
      %p147 = scmp.eq.s32.totalorder %s22, 1
      %p148 = scmp.ne.s32.totalorder %s143, %s145
      %p149 = scmp.eq.s32.totalorder %s22, 0
      %p150 = por %p148, %p149
      %p151 = scmp.ne.s32.totalorder %s143, %s145
      %p152 = scmp.eq.s32.totalorder %s27, 1
      %p153 = por %p151, %p152
      %p154 = scmp.ne.s32.totalorder %s145, %s146
      %p155 = scmp.eq.s32.totalorder %s27, 0
      %p156 = por %p154, %p155
      %p157 = scmp.ne.s32.totalorder %s145, %s146
      %p158 = scmp.eq.s32.totalorder %s28, 1
      %p159 = por %p157, %p158
      %p161 = scmp.ne.s32.totalorder %s146, %s160
      %p162 = scmp.eq.s32.totalorder %s28, 0
      %p163 = por %p161, %p162
      %s165 = sadd.s32 %s164, 1
      %p168 = scmp.eq.s32.totalorder %s22, 1
      %p169 = scmp.ne.s32.totalorder %s164, %s166
      %p170 = scmp.eq.s32.totalorder %s22, 0
      %p171 = por %p169, %p170
      %p172 = scmp.ne.s32.totalorder %s164, %s166
      %p173 = scmp.eq.s32.totalorder %s27, 1
      %p174 = por %p172, %p173
      %p175 = scmp.ne.s32.totalorder %s166, %s167
      %p176 = scmp.eq.s32.totalorder %s27, 0
      %p177 = por %p175, %p176
      %p178 = scmp.ne.s32.totalorder %s166, %s167
      %p179 = scmp.eq.s32.totalorder %s28, 1
      %p180 = por %p178, %p179
      %p182 = scmp.ne.s32.totalorder %s167, %s181
      %p183 = scmp.eq.s32.totalorder %s28, 0
      %p184 = por %p182, %p183
      %s186 = sadd.s32 %s185, 1
      %p189 = scmp.eq.s32.totalorder %s22, 1
      %p190 = scmp.ne.s32.totalorder %s185, %s187
      %p191 = scmp.eq.s32.totalorder %s22, 0
      %p192 = por %p190, %p191
      %p193 = scmp.ne.s32.totalorder %s185, %s187
      %p194 = scmp.eq.s32.totalorder %s27, 1
      %p195 = por %p193, %p194
      %p196 = scmp.ne.s32.totalorder %s187, %s188
      %p197 = scmp.eq.s32.totalorder %s27, 0
      %p198 = por %p196, %p197
      %p199 = scmp.ne.s32.totalorder %s187, %s188
      %p200 = scmp.eq.s32.totalorder %s28, 1
      %p201 = por %p199, %p200
      %p203 = scmp.ne.s32.totalorder %s188, %s202
      %p204 = scmp.eq.s32.totalorder %s28, 0
      %p205 = por %p203, %p204
      %s206 = ssub.s32 %s29, %s41
      %s207 = ssub.s32 %s30, %s37
      %s208 = sor.u32 %s206, %s207
      %p209 = scmp.eq.s32.totalorder %s208, 0
      %s211 = sadd.s32 %s210, 1
      %s212 = scalar_select %p209, %s210, %s211
      %p215 = pneg %p209
      %p216 = scmp.eq.s32.totalorder %s22, 1
      %p217 = por %p215, %p216
      %p218 = scmp.ne.s32.totalorder %s210, %s213
      %p219 = scmp.eq.s32.totalorder %s22, 0
      %p220 = por %p218, %p219
      %p221 = scmp.ne.s32.totalorder %s210, %s213
      %p222 = scmp.eq.s32.totalorder %s27, 1
      %p223 = por %p221, %p222
      %p224 = scmp.ne.s32.totalorder %s213, %s214
      %p225 = scmp.eq.s32.totalorder %s27, 0
      %p226 = por %p224, %p225
      %p227 = scmp.ne.s32.totalorder %s213, %s214
      %p228 = scmp.eq.s32.totalorder %s28, 1
      %p229 = por %p227, %p228
      %p231 = scmp.ne.s32.totalorder %s214, %s230
      %p232 = scmp.eq.s32.totalorder %s28, 0
      %p233 = por %p231, %p232
      %p234 = scmp.le.s32.totalorder 1, %s22
      %p235 = scmp.lt.s32.totalorder %s22, 3
      %p236 = pnand %p234, %p235
      %p237 = pneg %p236
      // Predicated region
      $region9: #{tpu_custom_call.1} parent=5 // pred_check
        _
      $region10: #{tpu_custom_call.1} parent=5 // pred_check_branch
        %239 = sbr.rel (%p236) target = $region12
      $region11: #{tpu_custom_call.1} parent=5 // pred_region
        %s240 = ssub.s32 %s22, 1
        // Predicated region
        $region13: #{tpu_custom_call.1} parent=11 // pred_check
          %p241 = pneg %p135
        $region14: #{tpu_custom_call.1} parent=11 // pred_check_branch
          %243 = sbr.rel (%p241) target = $region16
        $region15: #{tpu_custom_call.1} parent=11 // pred_region
          _
        $region16: #{tpu_custom_call.1} parent=11 // pred_fallthru
          _
        // Predicated region
        $region17: #{tpu_custom_call.1} parent=11 // pred_check
          %p244 = pneg %p156
        $region18: #{tpu_custom_call.1} parent=11 // pred_check_branch
          %246 = sbr.rel (%p244) target = $region20
        $region19: #{tpu_custom_call.1} parent=11 // pred_region
          _
        $region20: #{tpu_custom_call.1} parent=11 // pred_fallthru
          _
        // Predicated region
        $region21: #{tpu_custom_call.1} parent=11 // pred_check
          %p247 = pneg %p177
        $region22: #{tpu_custom_call.1} parent=11 // pred_check_branch
          %249 = sbr.rel (%p247) target = $region24
        $region23: #{tpu_custom_call.1} parent=11 // pred_region
          %s251 = ssub.s32 2048, 2048
          %252 = vsyncadd [#allocation6], %s251
          %s253 = sshll.u32 [#allocation7], 4
          %s254 = int_to_ptr.vmem [resolvable:$true] %s253
          %259 = dma.hbm_to_vmem [thread:$0]  %s5, 2048, %s254, [#allocation6], 128, 128, 8
        $region24: #{tpu_custom_call.1} parent=11 // pred_fallthru
          _
        // Predicated region
        $region25: #{tpu_custom_call.1} parent=11 // pred_check
          %p260 = pneg %p198
        $region26: #{tpu_custom_call.1} parent=11 // pred_check_branch
          %262 = sbr.rel (%p260) target = $region28
        $region27: #{tpu_custom_call.1} parent=11 // pred_region
          _
        $region28: #{tpu_custom_call.1} parent=11 // pred_fallthru
          _
      $region12: #{tpu_custom_call.1} parent=5 // pred_fallthru
        _
      %p263 = scmp.lt.s32.totalorder %s22, 2
      // Predicated region
      $region29: #{tpu_custom_call.1} parent=5 // pred_check
        %p264 = pneg %p263
      $region30: #{tpu_custom_call.1} parent=5 // pred_check_branch
        %266 = sbr.rel (%p264) target = $region32
      $region31: #{tpu_custom_call.1} parent=5 // pred_region
        // Predicated region
        $region33: #{tpu_custom_call.1} parent=31 // pred_check
          %p267 = pneg %p54
        $region34: #{tpu_custom_call.1} parent=31 // pred_check_branch
          %269 = sbr.rel (%p267) target = $region36
        $region35: #{tpu_custom_call.1} parent=31 // pred_region
          %s270 = sand.u32 %s44, 1
          %s271 = scalar_lea.sflag [#allocation3], %s270
          %s272 = sand.u32 %s44, 1
          %s273 = scalar_lea.vmem [#allocation2], %s272
          %s275 = ssub.s32 16, 16
          %276 = vsyncadd %s271, %s275
          %s277 = smul.addr %s29, 16
          %s278 = scalar_lea.hbm %s0, %s277
          %s280 = sshll.u32 %s273, 4
          %s281 = int_to_ptr.vmem [resolvable:$true] %s280
          %283 = dma.hbm_to_vmem [thread:$0]  %s278, 16, %s281, %s271
        $region36: #{tpu_custom_call.1} parent=31 // pred_fallthru
          _
        // Predicated region
        $region37: #{tpu_custom_call.1} parent=31 // pred_check
          %p284 = pneg %p80
        $region38: #{tpu_custom_call.1} parent=31 // pred_check_branch
          %286 = sbr.rel (%p284) target = $region40
        $region39: #{tpu_custom_call.1} parent=31 // pred_region
          %p287 = scmp.lt.s32.totalorder %s29, 1
          %s288 = scalar_select %p287, %s29, 1
          %s289 = scalar_lea.vmem %s1, %s288
        $region40: #{tpu_custom_call.1} parent=31 // pred_fallthru
          _
        // Predicated region
        $region41: #{tpu_custom_call.1} parent=31 // pred_check
          %p290 = pneg %p108
        $region42: #{tpu_custom_call.1} parent=31 // pred_check_branch
          %292 = sbr.rel (%p290) target = $region44
        $region43: #{tpu_custom_call.1} parent=31 // pred_region
          %s293 = sand.u32 %s22, 1
          %s294 = scalar_lea.sflag [#allocation6], %s293
          %s295 = sand.u32 %s98, 1
          %s296 = smul.addr %s295, 8
          %s297 = scalar_lea.vmem [#allocation5], %s296
          %s299 = ssub.s32 128, 128
          %300 = vsyncadd %s294, %s299
          %s301 = sadd.s32 %s30, %s29
          %s302 = smul.addr %s301, 128
          %s303 = scalar_lea.hbm %s2, %s302
          %s305 = sshll.u32 %s297, 4
          %s306 = int_to_ptr.vmem [resolvable:$true] %s305
          %308 = dma.hbm_to_vmem [thread:$0]  %s303, 128, %s306, %s294
        $region44: #{tpu_custom_call.1} parent=31 // pred_fallthru
          _
      $region32: #{tpu_custom_call.1} parent=5 // pred_fallthru
        _
      %p309 = scmp.le.s32.totalorder 1, %s22
      %p310 = scmp.lt.s32.totalorder %s22, 3
      %p311 = pnand %p309, %p310
      %p312 = pneg %p311
      // Predicated region
      $region45: #{tpu_custom_call.1} parent=5 // pred_check
        _
      $region46: #{tpu_custom_call.1} parent=5 // pred_check_branch
        %314 = sbr.rel (%p311) target = $region48
      $region47: #{tpu_custom_call.1} parent=5 // pred_region
        %s315 = ssub.s32 %s22, 1
        %s316 = sand.u32 %s47, 1
        %s317 = scalar_lea.sflag [#allocation3], %s316
        %s318 = sand.u32 %s47, 1
        %s319 = scalar_lea.vmem [#allocation2], %s318
        // Predicated region
        $region49: #{tpu_custom_call.1} parent=47 // pred_check
          %p320 = pneg %p60
        $region50: #{tpu_custom_call.1} parent=47 // pred_check_branch
          %322 = sbr.rel (%p320) target = $region52
        $region51: #{tpu_custom_call.1} parent=47 // pred_region
          %323 = dma.done %s317, 16
        $region52: #{tpu_custom_call.1} parent=47 // pred_fallthru
          _
        %s324 = sand.u32 %s27, 1
        %s325 = scalar_lea.sflag [#allocation6], %s324
        %s326 = sand.u32 %s101, 1
        %s327 = smul.addr %s326, 8
        %s328 = scalar_lea.vmem [#allocation5], %s327
        // Predicated region
        $region53: #{tpu_custom_call.1} parent=47 // pred_check
          %p329 = pneg %p114
        $region54: #{tpu_custom_call.1} parent=47 // pred_check_branch
          %331 = sbr.rel (%p329) target = $region56
        $region55: #{tpu_custom_call.1} parent=47 // pred_region
          %332 = dma.done %s325, 128
        $region56: #{tpu_custom_call.1} parent=47 // pred_fallthru
          _
        // Predicated region
        $region57: #{tpu_custom_call.1} parent=47 // pred_check
          %p333 = pneg %p177
        $region58: #{tpu_custom_call.1} parent=47 // pred_check_branch
          %335 = sbr.rel (%p333) target = $region60
        $region59: #{tpu_custom_call.1} parent=47 // pred_region
          %336 = dma.done [#allocation6], 2048
        $region60: #{tpu_custom_call.1} parent=47 // pred_fallthru
          _
        %s337 = sand.u32 %s47, 1
        %s338 = scalar_lea.sflag [#allocation3], %s337
        %s339 = sand.u32 %s47, 1
        %s340 = scalar_lea.vmem [#allocation2], %s339
        %p341 = pneg %p60
        %p342 = pneg %p57
        %p343 = scmp.lt.s32.totalorder %s31, 1
        %s344 = scalar_select %p343, %s31, 1
        %s345 = scalar_lea.vmem %s1, %s344
        %p346 = pneg %p86
        %p347 = pneg %p83
        %s348 = sand.u32 %s27, 1
        %s349 = scalar_lea.sflag [#allocation6], %s348
        %s350 = sand.u32 %s101, 1
        %s351 = smul.addr %s350, 8
        %s352 = scalar_lea.vmem [#allocation5], %s351
        %p353 = pneg %p114
        %p354 = pneg %p111
        %p355 = pneg %p135
        %p356 = pneg %p132
        %p357 = pneg %p156
        %p358 = pneg %p153
        %p359 = pneg %p177
        %p360 = pneg %p174
        %p361 = pneg %p198
        %p362 = pneg %p195
        %p363 = pneg %p226
        %p364 = pneg %p223
        %s365 = sand.u32 %s213, 1
        %s366 = scalar_lea.sflag [#allocation4], %s365
        %s367 = sand.u32 %s213, 1
        %s368 = smul.addr %s367, 8
        %s369 = scalar_lea.vmem [#allocation8], %s368
        %p370 = scmp.lt.s32.totalorder %s31, 1
        %s371 = scalar_select %p370, %s31, 1
        %s372 = scalar_lea.vmem %s1, %s371
        %v373 = vld [vmem:[%s328] sm:$0xff]
        %374 = vadd.xlane.f32.xlu0 %v373
        %v375 = vpop.xlane.xlu0 %374
        %v376 = vmul.f32 %v375, 0.03125
        %v377 = vmul.f32 %v373, %v373
        %378 = vadd.xlane.f32.xlu0 %v377
        %v379 = vpop.xlane.xlu0 %378
        %v380 = vmul.f32 %v379, 0.03125
        %v381 = vmul.f32 %v376, %v376
        %v382 = vsub.f32 %v380, %v381
        %v383 = vsub.f32 %v373, %v376
        %v384 = vadd.f32 %v382, 1e-05
        %v385 = vrsqrt.pop %v384
        %v386 = vmul.f32 %v383, %v385
        %v387 = vld [vmem:[%s3] sm:$0x1]
        %v389 = vlaneseq
        %v390 = vshrl.u32 %v389, 7
        %v391 = vsub.s32 0, %v390
        %v392 = vrot.slane %v387, %v391
        %v394 = vmul.f32 %v386, %v392
        %v395 = vld [vmem:[%s4] sm:$0x1]
        %v397 = vlaneseq
        %v398 = vshrl.u32 %v397, 7
        %v399 = vsub.s32 0, %v398
        %v400 = vrot.slane %v395, %v399
        %v402 = vadd.f32 %v394, %v400
        %v403 = vld [vmem:[%s319] sm:$0x1]
        %v404 = vld [vmem:[%s372] sm:$0x1]
        %v405 = vadd.f32 %v403, 1.0
        %v407 = vlaneseq
        %v408 = vshrl.u32 %v407, 7
        %v409 = vsub.s32 0, %v408
        %v410 = vrot.slane %v405, %v409
        %v412 = vmul.f32 %v402, %v410
        %v414 = vlaneseq
        %v415 = vshrl.u32 %v414, 7
        %v416 = vsub.s32 0, %v415
        %v417 = vrot.slane %v404, %v416
        %v419 = vadd.f32 %v412, %v417
        %v420 = vxor.u32 %v419, 2147483648
        %v421 = vmul.f32 %v420, 1.442695
        %v422 = vpow.pop %v421
        %v423 = vadd.f32 %v422, 1.0
        %v424 = vrcp.pop %v423
        %v425 = vmul.f32 1.0, %v424
        %v426 = vmul.f32 %v419, %v425
        %v427 = vld [vmem:[#allocation7] sm:$0xff]
        %v428 = vld [vmem:[#allocation7 + $0x8] sm:$0xff]
        %v429 = vld [vmem:[#allocation7 + $0x10] sm:$0xff]
        %v430 = vld [vmem:[#allocation7 + $0x18] sm:$0xff]
        %v431 = vld [vmem:[#allocation7 + $0x20] sm:$0xff]
        %v432 = vld [vmem:[#allocation7 + $0x28] sm:$0xff]
        %v433 = vld [vmem:[#allocation7 + $0x30] sm:$0xff]
        %v434 = vld [vmem:[#allocation7 + $0x38] sm:$0xff]
        %v435 = vld [vmem:[#allocation7 + $0x40] sm:$0xff]
        %v436 = vld [vmem:[#allocation7 + $0x48] sm:$0xff]
        %v437 = vld [vmem:[#allocation7 + $0x50] sm:$0xff]
        %v438 = vld [vmem:[#allocation7 + $0x58] sm:$0xff]
        %v439 = vld [vmem:[#allocation7 + $0x60] sm:$0xff]
        %v440 = vld [vmem:[#allocation7 + $0x68] sm:$0xff]
        %v441 = vld [vmem:[#allocation7 + $0x70] sm:$0xff]
        %v442 = vld [vmem:[#allocation7 + $0x78] sm:$0xff]
        %v443 = vld [vmem:[%s6] sm:$0x1]
        %v445 = vlaneseq
        %v446 = vshrl.u32 %v445, 7
        %v447 = vsub.s32 0, %v446
        %v448 = vrot.slane %v443, %v447
        %450 = vmatprep.subr.mxu0 0.0
        %451 = vmatpush1.msra.mxu0 %v427
        %452 = vmatprep.subr.mxu0 0.0
        %453 = vmatpush1.msra.mxu0 %v428
        %454 = vmatprep.subr.mxu0 0.0
        %455 = vmatpush1.msra.mxu0 %v429
        %456 = vmatprep.subr.mxu0 0.0
        %457 = vmatpush1.msra.mxu0 %v430
        %458 = vmatprep.subr.mxu0 0.0
        %459 = vmatpush1.msra.mxu0 %v431
        %460 = vmatprep.subr.mxu0 0.0
        %461 = vmatpush1.msra.mxu0 %v432
        %462 = vmatprep.subr.mxu0 0.0
        %463 = vmatpush1.msra.mxu0 %v433
        %464 = vmatprep.subr.mxu0 0.0
        %465 = vmatpush1.msra.mxu0 %v434
        %466 = vmatprep.subr.mxu0 0.0
        %467 = vmatpush1.msra.mxu0 %v435
        %468 = vmatprep.subr.mxu0 0.0
        %469 = vmatpush1.msra.mxu0 %v436
        %470 = vmatprep.subr.mxu0 0.0
        %471 = vmatpush1.msra.mxu0 %v437
        %472 = vmatprep.subr.mxu0 0.0
        %473 = vmatpush1.msra.mxu0 %v438
        %474 = vmatprep.subr.mxu0 0.0
        %475 = vmatpush1.msra.mxu0 %v439
        %476 = vmatprep.subr.mxu0 0.0
        %477 = vmatpush1.msra.mxu0 %v440
        %478 = vmatprep.subr.mxu0 0.0
        %479 = vmatpush1.msra.mxu0 %v441
        %480 = vmatprep.subr.mxu0 0.0
        %481 = vmatpush1.msra.mxu0 %v442
        %482 = vmatprep.subr.mxu0 0.0
        %483 = vmatpush1.msra.mxu0 0.0
        %484 = vmatprep.subr.mxu0 0.0
        %485 = vmatpush1.msra.mxu0 0.0
        %486 = vmatprep.subr.mxu0 0.0
        %487 = vmatpush1.msra.mxu0 0.0
        %488 = vmatprep.subr.mxu0 0.0
        %489 = vmatpush1.msra.mxu0 0.0
        %490 = vmatprep.subr.mxu0 0.0
        %491 = vmatpush1.msra.mxu0 0.0
        %492 = vmatprep.subr.mxu0 0.0
        %493 = vmatpush1.msra.mxu0 0.0
        %494 = vmatprep.subr.mxu0 0.0
        %495 = vmatpush1.msra.mxu0 0.0
        %496 = vmatprep.subr.mxu0 0.0
        %497 = vmatpush1.msra.mxu0 0.0
        %498 = vmatprep.subr.mxu0 0.0
        %499 = vmatpush1.msra.mxu0 0.0
        %500 = vmatprep.subr.mxu0 0.0
        %501 = vmatpush1.msra.mxu0 0.0
        %502 = vmatprep.subr.mxu0 0.0
        %503 = vmatpush1.msra.mxu0 0.0
        %504 = vmatprep.subr.mxu0 0.0
        %505 = vmatpush1.msra.mxu0 0.0
        %506 = vmatprep.subr.mxu0 0.0
        %507 = vmatpush1.msra.mxu0 0.0
        %508 = vmatprep.subr.mxu0 0.0
        %509 = vmatpush1.msra.mxu0 0.0
        %510 = vmatprep.subr.mxu0 0.0
        %511 = vmatpush1.msra.mxu0 0.0
        %512 = vmatprep.subr.mxu0 0.0
        %513 = vmatpush1.msra.mxu0 0.0
        %514 = vmatprep.mubr.f32.mxu0 0.0
        %515 = vmatmul.mubr.f32.gmra.mrb[0].mxu0 %v426
        %v516 = vpop.f32.mrb[0].mxu0
        %v517 = vadd.f32 %v448, %v516
        %v518 = vpop.f32.mrb[0].mxu0
        %519 = vdwg.mxu0
        %520 = vst [vmem:[%s369] sm:$0xff] %v517
        %s521 = sand.u32 %s213, 1
        %s522 = scalar_lea.sflag [#allocation4], %s521
        %s523 = sand.u32 %s213, 1
        %s524 = smul.addr %s523, 8
        %s525 = scalar_lea.vmem [#allocation8], %s524
        // Predicated region
        $region61: #{tpu_custom_call.1} parent=47 // pred_check
          %p526 = pneg %p223
        $region62: #{tpu_custom_call.1} parent=47 // pred_check_branch
          %528 = sbr.rel (%p526) target = $region64
        $region63: #{tpu_custom_call.1} parent=47 // pred_region
          %s530 = ssub.s32 128, 128
          %531 = vsyncadd %s522, %s530
          %s532 = sadd.s32 %s32, %s31
          %s533 = smul.addr %s532, 128
          %s534 = scalar_lea.hbm %s7, %s533
          %s536 = sshll.u32 %s525, 4
          %s537 = int_to_ptr.vmem [resolvable:$true] %s536
          %539 = dma.vmem_to_hbm [thread:$0]  %s537, 128, %s534, %s522
        $region64: #{tpu_custom_call.1} parent=47 // pred_fallthru
          _
      $region48: #{tpu_custom_call.1} parent=5 // pred_fallthru
        _
      %p540 = scmp.le.s32.totalorder 2, %s22
      // Predicated region
      $region65: #{tpu_custom_call.1} parent=5 // pred_check
        %p541 = pneg %p540
      $region66: #{tpu_custom_call.1} parent=5 // pred_check_branch
        %543 = sbr.rel (%p541) target = $region68
      $region67: #{tpu_custom_call.1} parent=5 // pred_region
        %s544 = ssub.s32 %s22, 2
        // Predicated region
        $region69: #{tpu_custom_call.1} parent=67 // pred_check
          %p545 = pneg %p229
        $region70: #{tpu_custom_call.1} parent=67 // pred_check_branch
          %547 = sbr.rel (%p545) target = $region72
        $region71: #{tpu_custom_call.1} parent=67 // pred_region
          %s548 = sand.u32 %s214, 1
          %s549 = scalar_lea.sflag [#allocation4], %s548
          %s550 = sand.u32 %s214, 1
          %s551 = smul.addr %s550, 8
          %s552 = scalar_lea.vmem [#allocation8], %s551
          %553 = dma.done %s549, 128
        $region72: #{tpu_custom_call.1} parent=67 // pred_fallthru
          _
      $region68: #{tpu_custom_call.1} parent=5 // pred_fallthru
        _
    $region6: #{tpu_custom_call.1} parent=1 // loop_footer
      %s26 = sadd.s32 1, %s22
    $region7: #{tpu_custom_call.1} parent=1 // loop_footer_branch
      %21 = sbr.rel target = $region3
    $region8: #{tpu_custom_call.1} parent=1 // loop_exit
      _
    %554 = vsyncpa [#allocation3], 1
    %s555 = scalar_lea.sflag [#allocation3], 1
    %556 = vsyncpa %s555, 1
    %557 = vsyncpa [#allocation6], 1
    %s558 = scalar_lea.sflag [#allocation6], 1
    %559 = vsyncpa %s558, 1
    %560 = vsyncpa [#allocation4], 1
    %s561 = scalar_lea.sflag [#allocation4], 1
    %562 = vsyncpa %s561, 1

</llo_original>
